<compile_context>
chip_gen: v7x
topology: tpu7x:2x2x1
jax: 0.10.0
libtpu: 0.0.40
codegen_flags: <defaults>
</compile_context>

<pallas_src>
import jax
import jax.numpy as jnp
from jax.experimental import pallas as pl
from jax.experimental.pallas import tpu as pltpu

K_IN = 28 * 28   # 784 input features
K_PAD = 896      # 7 * 128 -> lane-dense padded feature dim
H_PAD = 128      # hidden dim padded to lane width
N_OUT = 10       # logits
N_PAD = 128      # lane-dense padded output dim


def _quantize_weight_3bit(w):
    """Per-tensor symmetric 3-bit quant. Returns integer q-values and the scale."""
    qmax = 3.0
    qmin = -4.0
    # TODO(synk): some PyTorch fake-quant configs use the restricted range -3..3;
    # verify against the reference LinearQuant if bit-exact parity is required.
    s = jnp.max(jnp.abs(w)) / qmax
    s = jnp.where(s > 0.0, s, 1.0)
    q = jnp.clip(jnp.round(w / s), qmin, qmax)
    return q, s


def prepare_weights(w1, w2):
    """One-time (model init) weight prep, hoisted out of the per-call kernel.

    w1: (model_dim, 784), w2: (10, model_dim) in PyTorch (out, in) convention.
    Returns integer 3-bit q-values, transposed to (in, out), zero-padded to
    lane-dense shapes and cast to bf16, plus the two weight scales.
    """
    H = w1.shape[0]
    assert H <= H_PAD and w2.shape == (N_OUT, H)
    q1, s1 = _quantize_weight_3bit(w1.astype(jnp.float32))   # (H, 784)
    q2, s2 = _quantize_weight_3bit(w2.astype(jnp.float32))   # (10, H)
    qw1_p = jnp.zeros((K_PAD, H_PAD), jnp.float32).at[:K_IN, :H].set(q1.T)
    qw2_p = jnp.zeros((H_PAD, N_PAD), jnp.float32).at[:H, :N_OUT].set(q2.T)
    w_scales = jnp.stack([s1, s2]).astype(jnp.float32)        # (2,)
    return qw1_p.astype(jnp.bfloat16), qw2_p.astype(jnp.bfloat16), w_scales


def linear_model_kernel(scales_ref, x_ref, qw1_ref, qw2_ref, out_ref):
    # scales_ref : SMEM (2,) f32 = [s_w1, s_w2] (3-bit weight scales)
    # x_ref      : (Bp, K_PAD)  f32  zero-padded image rows
    # qw1_ref    : (K_PAD, H_PAD) bf16 integer q-values in [-4, 3]
    # qw2_ref    : (H_PAD, N_PAD) bf16 integer q-values in [-4, 3]
    # out_ref    : (Bp, N_PAD)  f32
    x = x_ref[...]

    # --- activation_quant_l1_in (8-bit per-tensor symmetric) ---
    s_x = jnp.max(jnp.abs(x), keepdims=True) / 127.0          # (1, 1)
    s_x = jnp.where(s_x > 0.0, s_x, 1.0)
    qx = jnp.clip(jnp.round(x * pl.reciprocal(s_x, approx=True)), -128.0, 127.0)

    # --- linear_1: exact integer matmul on the MXU (bf16 operands, f32 acc) ---
    acc1 = jnp.dot(qx.astype(jnp.bfloat16), qw1_ref[...],
                   preferred_element_type=jnp.float32)
    h = acc1 * (s_x * scales_ref[0])                          # dequant: s_x * s_w1

    # --- activation_quant_l1_out + tanh ---
    s_h = jnp.max(jnp.abs(h), keepdims=True) / 127.0
    s_h = jnp.where(s_h > 0.0, s_h, 1.0)
    h_fq = jnp.clip(jnp.round(h * pl.reciprocal(s_h, approx=True)),
                    -128.0, 127.0) * s_h
    t = jnp.tanh(h_fq)

    # --- activation_quant_final_in (keep integer q-values for the MXU) ---
    s_t = jnp.max(jnp.abs(t), keepdims=True) / 127.0
    s_t = jnp.where(s_t > 0.0, s_t, 1.0)
    qt = jnp.clip(jnp.round(t * pl.reciprocal(s_t, approx=True)), -128.0, 127.0)

    # --- final_linear ---
    acc2 = jnp.dot(qt.astype(jnp.bfloat16), qw2_ref[...],
                   preferred_element_type=jnp.float32)
    logits = acc2 * (s_t * scales_ref[1])                     # dequant: s_t * s_w2

    # --- activation_quant_final_out (fake quant, dequantized output) ---
    s_o = jnp.max(jnp.abs(logits), keepdims=True) / 127.0
    s_o = jnp.where(s_o > 0.0, s_o, 1.0)
    out_ref[...] = jnp.clip(jnp.round(logits * pl.reciprocal(s_o, approx=True)),
                            -128.0, 127.0) * s_o


@jax.jit
def linear_model_forward(image, qw1_p, qw2_p, w_scales):
    """image: (B, 1, 28, 28) fp32.  Weights already prepared by prepare_weights()."""
    B = image.shape[0]
    Bp = max(8, ((B + 7) // 8) * 8)                           # sublane-aligned batch
    x = image.reshape(B, K_IN).astype(jnp.float32)
    # Zero padding: safe for the per-tensor abs-max scales (zeros never win the max)
    # and padded rows/cols propagate as exact zeros through both matmuls.
    x = jnp.pad(x, ((0, Bp - B), (0, K_PAD - K_IN)))

    out_p = pl.pallas_call(
        linear_model_kernel,
        out_shape=jax.ShapeDtypeStruct((Bp, N_PAD), jnp.float32),
        in_specs=[
            pl.BlockSpec(memory_space=pltpu.MemorySpace.SMEM),   # weight scales
            pl.BlockSpec(memory_space=pltpu.MemorySpace.VMEM),   # x
            pl.BlockSpec(memory_space=pltpu.MemorySpace.VMEM),   # qW1 (in, out)
            pl.BlockSpec(memory_space=pltpu.MemorySpace.VMEM),   # qW2 (in, out)
        ],
        out_specs=pl.BlockSpec(memory_space=pltpu.MemorySpace.VMEM),
    )(w_scales, x, qw1_p, qw2_p)
    return out_p[:B, :N_OUT]


if __name__ == "__main__":
    B = 2
    MODEL_DIM = 32  # small hidden size; constructor allows any model_dim > 0

    key = jax.random.PRNGKey(0)
    k_img, k_w1, k_w2 = jax.random.split(key, 3)

    image = jax.random.normal(k_img, (B, 1, 28, 28), dtype=jnp.float32)

    # Deterministic init, matching nn.Linear default bound = 1/sqrt(in_features).
    b1 = 1.0 / (28 * 28) ** 0.5
    b2 = 1.0 / MODEL_DIM ** 0.5
    w1 = jax.random.uniform(k_w1, (MODEL_DIM, 28 * 28), jnp.float32, -b1, b1)
    w2 = jax.random.uniform(k_w2, (10, MODEL_DIM), jnp.float32, -b2, b2)

    # One-time weight preparation (model-init time): 3-bit fake-quant, transpose, pad.
    qw1_p, qw2_p, w_scales = prepare_weights(w1, w2)

    out = linear_model_forward(image, qw1_p, qw2_p, w_scales)
    jax.block_until_ready(out)
    assert out.shape == (B, 10) and out.dtype == jnp.float32
    print("KERNEL_OK")
</pallas_src>

<mosaic_0001>
module attributes {stable_mosaic.version = 11 : i64} {
  func.func @linear_model_kernel(%arg0: memref<2xf32, #tpu.memory_space<smem>>, %arg1: memref<8x896xf32, #tpu.memory_space<vmem>>, %arg2: memref<896x128xbf16, #tpu.memory_space<vmem>>, %arg3: memref<128x128xbf16, #tpu.memory_space<vmem>>, %arg4: memref<8x128xf32, #tpu.memory_space<vmem>>) attributes {dimension_semantics = [], scalar_prefetch = 0 : i64, scratch_operands = 0 : i64, tpu.core_type = #tpu.core_type<tc>} {
    %c0 = arith.constant 0 : index
    %c0_0 = arith.constant 0 : index
    %0 = vector.load %arg1[%c0, %c0_0] : memref<8x896xf32, #tpu.memory_space<vmem>>, vector<8x896xf32>
    %1 = math.absf %0 : vector<8x896xf32>
    %2 = vector.shape_cast %1 : vector<8x896xf32> to vector<1x8x896xf32>
    %cst = arith.constant dense<0xFF800000> : vector<1xf32>
    %3 = vector.multi_reduction <maximumf>, %2, %cst [1, 2] : vector<1x8x896xf32> to vector<1xf32>
    %4 = vector.shape_cast %3 : vector<1xf32> to vector<1x1x1xf32>
    %5 = vector.extract %4[0, 0, 0] : f32 from vector<1x1x1xf32>
    %6 = vector.broadcast %5 : f32 to vector<1x1xf32>
    %cst_1 = arith.constant 1.270000e+02 : f32
    %7 = vector.broadcast %cst_1 : f32 to vector<1x1xf32>
    %8 = arith.divf %6, %7 : vector<1x1xf32>
    %cst_2 = arith.constant 0.000000e+00 : f32
    %9 = vector.broadcast %cst_2 : f32 to vector<1x1xf32>
    %10 = arith.cmpf ogt, %8, %9 : vector<1x1xf32>
    %cst_3 = arith.constant 1.000000e+00 : f32
    %11 = vector.broadcast %cst_3 : f32 to vector<1x1xf32>
    %12 = arith.select %10, %8, %11 : vector<1x1xi1>, vector<1x1xf32>
    %13 = tpu.reciprocal %12 {approx = true} : vector<1x1xf32> -> vector<1x1xf32>
    %14 = vector.broadcast %13 : vector<1x1xf32> to vector<8x896xf32>
    %15 = arith.mulf %0, %14 : vector<8x896xf32>
    %16 = math.roundeven %15 : vector<8x896xf32>
    %cst_4 = arith.constant -1.280000e+02 : f32
    %cst_5 = arith.constant 1.270000e+02 : f32
    %17 = vector.broadcast %cst_4 : f32 to vector<8x896xf32>
    %18 = arith.maximumf %17, %16 : vector<8x896xf32>
    %19 = vector.broadcast %cst_5 : f32 to vector<8x896xf32>
    %20 = arith.minimumf %19, %18 : vector<8x896xf32>
    %21 = arith.truncf %20 : vector<8x896xf32> to vector<8x896xbf16>
    %c0_6 = arith.constant 0 : index
    %c0_7 = arith.constant 0 : index
    %22 = vector.load %arg2[%c0_6, %c0_7] : memref<896x128xbf16, #tpu.memory_space<vmem>>, vector<896x128xbf16>
    %cst_8 = arith.constant dense<0.000000e+00> : vector<8x128xf32>
    %23 = tpu.matmul %21, %22, %cst_8 {dimension_numbers = #tpu.dot_dimension_numbers<[1], [0], [0], [1], [0, 0, 1, 1], [], []>} : vector<8x896xbf16>, vector<896x128xbf16>, vector<8x128xf32> -> vector<8x128xf32>
    %c0_9 = arith.constant 0 : index
    %24 = memref.load %arg0[%c0_9] : memref<2xf32, #tpu.memory_space<smem>>
    %25 = vector.broadcast %24 : f32 to vector<1x1xf32>
    %26 = arith.mulf %12, %25 : vector<1x1xf32>
    %27 = vector.broadcast %26 : vector<1x1xf32> to vector<8x128xf32>
    %28 = arith.mulf %23, %27 : vector<8x128xf32>
    %29 = math.absf %28 : vector<8x128xf32>
    %30 = vector.shape_cast %29 : vector<8x128xf32> to vector<1x8x128xf32>
    %cst_10 = arith.constant dense<0xFF800000> : vector<1xf32>
    %31 = vector.multi_reduction <maximumf>, %30, %cst_10 [1, 2] : vector<1x8x128xf32> to vector<1xf32>
    %32 = vector.shape_cast %31 : vector<1xf32> to vector<1x1x1xf32>
    %33 = vector.extract %32[0, 0, 0] : f32 from vector<1x1x1xf32>
    %34 = vector.broadcast %33 : f32 to vector<1x1xf32>
    %cst_11 = arith.constant 1.270000e+02 : f32
    %35 = vector.broadcast %cst_11 : f32 to vector<1x1xf32>
    %36 = arith.divf %34, %35 : vector<1x1xf32>
    %cst_12 = arith.constant 0.000000e+00 : f32
    %37 = vector.broadcast %cst_12 : f32 to vector<1x1xf32>
    %38 = arith.cmpf ogt, %36, %37 : vector<1x1xf32>
    %cst_13 = arith.constant 1.000000e+00 : f32
    %39 = vector.broadcast %cst_13 : f32 to vector<1x1xf32>
    %40 = arith.select %38, %36, %39 : vector<1x1xi1>, vector<1x1xf32>
    %41 = tpu.reciprocal %40 {approx = true} : vector<1x1xf32> -> vector<1x1xf32>
    %42 = vector.broadcast %41 : vector<1x1xf32> to vector<8x128xf32>
    %43 = arith.mulf %28, %42 : vector<8x128xf32>
    %44 = math.roundeven %43 : vector<8x128xf32>
    %cst_14 = arith.constant -1.280000e+02 : f32
    %cst_15 = arith.constant 1.270000e+02 : f32
    %45 = vector.broadcast %cst_14 : f32 to vector<8x128xf32>
    %46 = arith.maximumf %45, %44 : vector<8x128xf32>
    %47 = vector.broadcast %cst_15 : f32 to vector<8x128xf32>
    %48 = arith.minimumf %47, %46 : vector<8x128xf32>
    %49 = vector.broadcast %40 : vector<1x1xf32> to vector<8x128xf32>
    %50 = arith.mulf %48, %49 : vector<8x128xf32>
    %51 = math.tanh %50 : vector<8x128xf32>
    %52 = math.absf %51 : vector<8x128xf32>
    %53 = vector.shape_cast %52 : vector<8x128xf32> to vector<1x8x128xf32>
    %cst_16 = arith.constant dense<0xFF800000> : vector<1xf32>
    %54 = vector.multi_reduction <maximumf>, %53, %cst_16 [1, 2] : vector<1x8x128xf32> to vector<1xf32>
    %55 = vector.shape_cast %54 : vector<1xf32> to vector<1x1x1xf32>
    %56 = vector.extract %55[0, 0, 0] : f32 from vector<1x1x1xf32>
    %57 = vector.broadcast %56 : f32 to vector<1x1xf32>
    %cst_17 = arith.constant 1.270000e+02 : f32
    %58 = vector.broadcast %cst_17 : f32 to vector<1x1xf32>
    %59 = arith.divf %57, %58 : vector<1x1xf32>
    %cst_18 = arith.constant 0.000000e+00 : f32
    %60 = vector.broadcast %cst_18 : f32 to vector<1x1xf32>
    %61 = arith.cmpf ogt, %59, %60 : vector<1x1xf32>
    %cst_19 = arith.constant 1.000000e+00 : f32
    %62 = vector.broadcast %cst_19 : f32 to vector<1x1xf32>
    %63 = arith.select %61, %59, %62 : vector<1x1xi1>, vector<1x1xf32>
    %64 = tpu.reciprocal %63 {approx = true} : vector<1x1xf32> -> vector<1x1xf32>
    %65 = vector.broadcast %64 : vector<1x1xf32> to vector<8x128xf32>
    %66 = arith.mulf %51, %65 : vector<8x128xf32>
    %67 = math.roundeven %66 : vector<8x128xf32>
    %cst_20 = arith.constant -1.280000e+02 : f32
    %cst_21 = arith.constant 1.270000e+02 : f32
    %68 = vector.broadcast %cst_20 : f32 to vector<8x128xf32>
    %69 = arith.maximumf %68, %67 : vector<8x128xf32>
    %70 = vector.broadcast %cst_21 : f32 to vector<8x128xf32>
    %71 = arith.minimumf %70, %69 : vector<8x128xf32>
    %72 = arith.truncf %71 : vector<8x128xf32> to vector<8x128xbf16>
    %c0_22 = arith.constant 0 : index
    %c0_23 = arith.constant 0 : index
    %73 = vector.load %arg3[%c0_22, %c0_23] : memref<128x128xbf16, #tpu.memory_space<vmem>>, vector<128x128xbf16>
    %cst_24 = arith.constant dense<0.000000e+00> : vector<8x128xf32>
    %74 = tpu.matmul %72, %73, %cst_24 {dimension_numbers = #tpu.dot_dimension_numbers<[1], [0], [0], [1], [0, 0, 1, 1], [], []>} : vector<8x128xbf16>, vector<128x128xbf16>, vector<8x128xf32> -> vector<8x128xf32>
    %c1 = arith.constant 1 : index
    %75 = memref.load %arg0[%c1] : memref<2xf32, #tpu.memory_space<smem>>
    %76 = vector.broadcast %75 : f32 to vector<1x1xf32>
    %77 = arith.mulf %63, %76 : vector<1x1xf32>
    %78 = vector.broadcast %77 : vector<1x1xf32> to vector<8x128xf32>
    %79 = arith.mulf %74, %78 : vector<8x128xf32>
    %80 = math.absf %79 : vector<8x128xf32>
    %81 = vector.shape_cast %80 : vector<8x128xf32> to vector<1x8x128xf32>
    %cst_25 = arith.constant dense<0xFF800000> : vector<1xf32>
    %82 = vector.multi_reduction <maximumf>, %81, %cst_25 [1, 2] : vector<1x8x128xf32> to vector<1xf32>
    %83 = vector.shape_cast %82 : vector<1xf32> to vector<1x1x1xf32>
    %84 = vector.extract %83[0, 0, 0] : f32 from vector<1x1x1xf32>
    %85 = vector.broadcast %84 : f32 to vector<1x1xf32>
    %cst_26 = arith.constant 1.270000e+02 : f32
    %86 = vector.broadcast %cst_26 : f32 to vector<1x1xf32>
    %87 = arith.divf %85, %86 : vector<1x1xf32>
    %cst_27 = arith.constant 0.000000e+00 : f32
    %88 = vector.broadcast %cst_27 : f32 to vector<1x1xf32>
    %89 = arith.cmpf ogt, %87, %88 : vector<1x1xf32>
    %cst_28 = arith.constant 1.000000e+00 : f32
    %90 = vector.broadcast %cst_28 : f32 to vector<1x1xf32>
    %91 = arith.select %89, %87, %90 : vector<1x1xi1>, vector<1x1xf32>
    %92 = tpu.reciprocal %91 {approx = true} : vector<1x1xf32> -> vector<1x1xf32>
    %93 = vector.broadcast %92 : vector<1x1xf32> to vector<8x128xf32>
    %94 = arith.mulf %79, %93 : vector<8x128xf32>
    %95 = math.roundeven %94 : vector<8x128xf32>
    %cst_29 = arith.constant -1.280000e+02 : f32
    %cst_30 = arith.constant 1.270000e+02 : f32
    %96 = vector.broadcast %cst_29 : f32 to vector<8x128xf32>
    %97 = arith.maximumf %96, %95 : vector<8x128xf32>
    %98 = vector.broadcast %cst_30 : f32 to vector<8x128xf32>
    %99 = arith.minimumf %98, %97 : vector<8x128xf32>
    %100 = vector.broadcast %91 : vector<1x1xf32> to vector<8x128xf32>
    %101 = arith.mulf %99, %100 : vector<8x128xf32>
    %c0_31 = arith.constant 0 : index
    %c0_32 = arith.constant 0 : index
    %102 = vector.load %arg4[%c0_31, %c0_32] : memref<8x128xf32, #tpu.memory_space<vmem>>, vector<8x128xf32>
    tpu.vector_store %arg4[%c0_31, %c0_32], %101 {strides = array<i32>} : memref<8x128xf32, #tpu.memory_space<vmem>>, vector<8x128xf32>,
    return
  }
}

</mosaic_0001>

<llo_original>
// kernel: linear_model_forward.1
$region0: #{linear_model_forward.1}
  #allocation0 [shape = 'u32[]', space=smem, size = 0x4, offset = 0x4, fixed_abs, tag = 'smem constant byte address 0x4 - core index']
  #allocation1 [shape = 'u32[144,128]{1,0:T(1,128)}', space=vmem, size = 0x12000, scoped, tag = 'internal scratch']
  %s0 = inlined_call_operand.vmem [shape: f32[2], index: 0, kind: input, shape index: {}]
  %s1 = inlined_call_operand.vmem [shape: f32[8,896], index: 1, kind: input, shape index: {}]
  %s2 = inlined_call_operand.hbm [shape: bf16[896,128], index: 2, kind: input, shape index: {}]
  %s3 = inlined_call_operand.vmem [shape: bf16[128,128], index: 3, kind: input, shape index: {}]
  %s4 = inlined_call_operand.vmem [shape: f32[8,128], index: 4, kind: output, shape index: {}]
  %s5 = sld [smem:[#allocation0]]
  $region34: #{linear_model_forward.1} parent=0
    _
  %s7 = ssub.s32 1, %s5
  %s8 = scalar_select 0, %s7, %s5
  $region1: #{linear_model_forward.1} parent=0
    #allocation2 [shape = 'u8[512]{0}', space=smem, size = 0x200, scoped, tag = 'input window, operand 0, single buffered']
    #allocation3 [shape = 's32[1]{0}', space=sflag, size = 0x4, scoped, tag = 'scoped memory for linear_model_forward.1']
    #allocation4 [shape = 's32[1]{0}', space=sflag, size = 0x4, scoped, tag = 'scoped memory for linear_model_forward.1']
    #allocation5 [shape = 'u8[229376]{0}', space=vmem, size = 0x38000, scoped, tag = 'input window, operand 2, single buffered']
    %9 = vsyncpa [#allocation4], 0
    %10 = vsyncpa [#allocation3], 0
    // Predicated region
    $region2: #{linear_model_forward.1} parent=1 // pred_check
      _
    $region3: #{linear_model_forward.1} parent=1 // pred_check_branch
      %12 = sbr.rel (0) target = $region5
    $region4: #{linear_model_forward.1} parent=1 // pred_region
      %s14 = ssub.s32 16, 16
      %15 = vsyncadd [#allocation4], %s14
      %s17 = sshll.u32 %s0, 4
      %s18 = int_to_ptr.vmem [resolvable:$true] %s17
      %20 = dma.vmem_to_smem %s18, 16, [#allocation2], [#allocation4]
    $region5: #{linear_model_forward.1} parent=1 // pred_fallthru
      _
    // Predicated region
    $region6: #{linear_model_forward.1} parent=1 // pred_check
      _
    $region7: #{linear_model_forward.1} parent=1 // pred_check_branch
      %22 = sbr.rel (0) target = $region9
    $region8: #{linear_model_forward.1} parent=1 // pred_region
      _
    $region9: #{linear_model_forward.1} parent=1 // pred_fallthru
      _
    // Predicated region
    $region10: #{linear_model_forward.1} parent=1 // pred_check
      _
    $region11: #{linear_model_forward.1} parent=1 // pred_check_branch
      %24 = sbr.rel (0) target = $region13
    $region12: #{linear_model_forward.1} parent=1 // pred_region
      %s26 = ssub.s32 7168, 7168
      %27 = vsyncadd [#allocation3], %s26
      %s28 = sshll.u32 [#allocation5], 4
      %s29 = int_to_ptr.vmem [resolvable:$true] %s28
      %34 = dma.hbm_to_vmem [thread:$0]  %s2, 7168, %s29, [#allocation3], 64, 64, 4
    $region13: #{linear_model_forward.1} parent=1 // pred_fallthru
      _
    // Predicated region
    $region14: #{linear_model_forward.1} parent=1 // pred_check
      _
    $region15: #{linear_model_forward.1} parent=1 // pred_check_branch
      %36 = sbr.rel (0) target = $region17
    $region16: #{linear_model_forward.1} parent=1 // pred_region
      _
    $region17: #{linear_model_forward.1} parent=1 // pred_fallthru
      _
    // Predicated region
    $region18: #{linear_model_forward.1} parent=1 // pred_check
      _
    $region19: #{linear_model_forward.1} parent=1 // pred_check_branch
      %38 = sbr.rel (0) target = $region21
    $region20: #{linear_model_forward.1} parent=1 // pred_region
      %39 = dma.done [#allocation4], 16
    $region21: #{linear_model_forward.1} parent=1 // pred_fallthru
      _
    // Predicated region
    $region22: #{linear_model_forward.1} parent=1 // pred_check
      _
    $region23: #{linear_model_forward.1} parent=1 // pred_check_branch
      %41 = sbr.rel (0) target = $region25
    $region24: #{linear_model_forward.1} parent=1 // pred_region
      %42 = dma.done [#allocation3], 7168
    $region25: #{linear_model_forward.1} parent=1 // pred_fallthru
      _
    %43 = sfence
    %v45 = vld [vmem:[%s1] sm:$0xff]
    %v46 = vld [vmem:[%s1 + $0x8] sm:$0xff]
    %v47 = vld [vmem:[%s1 + $0x10] sm:$0xff]
    %v48 = vld [vmem:[%s1 + $0x18] sm:$0xff]
    %v49 = vld [vmem:[%s1 + $0x20] sm:$0xff]
    %v50 = vld [vmem:[%s1 + $0x28] sm:$0xff]
    %v51 = vld [vmem:[%s1 + $0x30] sm:$0xff]
    %v52 = vand.u32 2147483647, %v45
    %v53 = vand.u32 2147483647, %v46
    %v54 = vand.u32 2147483647, %v47
    %v55 = vand.u32 2147483647, %v48
    %v56 = vand.u32 2147483647, %v49
    %v57 = vand.u32 2147483647, %v50
    %v58 = vand.u32 2147483647, %v51
    %v59 = vmax.f32 %v52, %v56
    %v60 = vmax.f32 %v53, %v57
    %v61 = vmax.f32 %v54, %v58
    %v62 = vmax.f32 %v59, %v60
    %v63 = vmax.f32 %v61, %v55
    %v64 = vmax.f32 %v62, %v63
    %65 = vmax.xlane.f32.xlu0 %v64
    %v66 = vpop.xlane.xlu0 %65
    %v67 = vrot.slane %v66, 4
    %v68 = vmax.f32 %v66, %v67
    %v69 = vrot.slane %v68, 2
    %v70 = vmax.f32 %v68, %v69
    %v71 = vrot.slane %v70, 1
    %v72 = vmax.f32 %v70, %v71
    %s73 = vtos %v72
    %v74 = vstv %s73
    %v75 = vrcp.pop 127.0
    %v76 = vmul.f32 %v74, %v75
    %vm77 = vcmp.gt.f32.partialorder %v76, 0.0
    %v78 = vsel %vm77, %v76, 1.0
    %v79 = vrcp.pop %v78
    %v80 = vmul.f32 %v45, %v79
    %v81 = vmul.f32 %v46, %v79
    %v82 = vmul.f32 %v47, %v79
    %v83 = vmul.f32 %v48, %v79
    %v84 = vmul.f32 %v49, %v79
    %v85 = vmul.f32 %v50, %v79
    %v86 = vmul.f32 %v51, %v79
    %v87 = vround.ne.pseudo %v80
    %v88 = vround.ne.pseudo %v81
    %v89 = vround.ne.pseudo %v82
    %v90 = vround.ne.pseudo %v83
    %v91 = vround.ne.pseudo %v84
    %v92 = vround.ne.pseudo %v85
    %v93 = vround.ne.pseudo %v86
    %v94 = vmax.f32 %v87, -128.0
    %v95 = vmax.f32 %v88, -128.0
    %v96 = vmax.f32 %v89, -128.0
    %v97 = vmax.f32 %v90, -128.0
    %v98 = vmax.f32 %v91, -128.0
    %v99 = vmax.f32 %v92, -128.0
    %v100 = vmax.f32 %v93, -128.0
    %v101 = vmin.f32 %v94, 127.0
    %v102 = vmin.f32 %v95, 127.0
    %v103 = vmin.f32 %v96, 127.0
    %v104 = vmin.f32 %v97, 127.0
    %v105 = vmin.f32 %v98, 127.0
    %v106 = vmin.f32 %v99, 127.0
    %v107 = vmin.f32 %v100, 127.0
    %v108 = vpack.c.bf16 %v101, %v101
    %v109 = vpack.c.bf16 %v102, %v102
    %v110 = vpack.c.bf16 %v103, %v103
    %v111 = vpack.c.bf16 %v104, %v104
    %v112 = vpack.c.bf16 %v105, %v105
    %v113 = vpack.c.bf16 %v106, %v106
    %v114 = vpack.c.bf16 %v107, %v107
    %v115 = vld [vmem:[#allocation5] sm:$0xf]
    %v116 = vld [vmem:[#allocation5 + $0x4] sm:$0xf]
    %v117 = vld [vmem:[#allocation5 + $0x8] sm:$0xf]
    %v118 = vld [vmem:[#allocation5 + $0xc] sm:$0xf]
    %v119 = vld [vmem:[#allocation5 + $0x10] sm:$0xf]
    %v120 = vld [vmem:[#allocation5 + $0x14] sm:$0xf]
    %v121 = vld [vmem:[#allocation5 + $0x18] sm:$0xf]
    %v122 = vld [vmem:[#allocation5 + $0x1c] sm:$0xf]
    %v123 = vld [vmem:[#allocation5 + $0x20] sm:$0xf]
    %v124 = vld [vmem:[#allocation5 + $0x24] sm:$0xf]
    %v125 = vld [vmem:[#allocation5 + $0x28] sm:$0xf]
    %v126 = vld [vmem:[#allocation5 + $0x2c] sm:$0xf]
    %v127 = vld [vmem:[#allocation5 + $0x30] sm:$0xf]
    %v128 = vld [vmem:[#allocation5 + $0x34] sm:$0xf]
    %v129 = vld [vmem:[#allocation5 + $0x38] sm:$0xf]
    %v130 = vld [vmem:[#allocation5 + $0x3c] sm:$0xf]
    %v131 = vld [vmem:[#allocation5 + $0x40] sm:$0xf]
    %v132 = vld [vmem:[#allocation5 + $0x44] sm:$0xf]
    %v133 = vld [vmem:[#allocation5 + $0x48] sm:$0xf]
    %v134 = vld [vmem:[#allocation5 + $0x4c] sm:$0xf]
    %v135 = vld [vmem:[#allocation5 + $0x50] sm:$0xf]
    %v136 = vld [vmem:[#allocation5 + $0x54] sm:$0xf]
    %v137 = vld [vmem:[#allocation5 + $0x58] sm:$0xf]
    %v138 = vld [vmem:[#allocation5 + $0x5c] sm:$0xf]
    %v139 = vld [vmem:[#allocation5 + $0x60] sm:$0xf]
    %v140 = vld [vmem:[#allocation5 + $0x64] sm:$0xf]
    %v141 = vld [vmem:[#allocation5 + $0x68] sm:$0xf]
    %v142 = vld [vmem:[#allocation5 + $0x6c] sm:$0xf]
    %v143 = vld [vmem:[#allocation5 + $0x70] sm:$0xf]
    %v144 = vld [vmem:[#allocation5 + $0x74] sm:$0xf]
    %v145 = vld [vmem:[#allocation5 + $0x78] sm:$0xf]
    %v146 = vld [vmem:[#allocation5 + $0x7c] sm:$0xf]
    %v147 = vld [vmem:[#allocation5 + $0x80] sm:$0xf]
    %v148 = vld [vmem:[#allocation5 + $0x84] sm:$0xf]
    %v149 = vld [vmem:[#allocation5 + $0x88] sm:$0xf]
    %v150 = vld [vmem:[#allocation5 + $0x8c] sm:$0xf]
    %v151 = vld [vmem:[#allocation5 + $0x90] sm:$0xf]
    %v152 = vld [vmem:[#allocation5 + $0x94] sm:$0xf]
    %v153 = vld [vmem:[#allocation5 + $0x98] sm:$0xf]
    %v154 = vld [vmem:[#allocation5 + $0x9c] sm:$0xf]
    %v155 = vld [vmem:[#allocation5 + $0xa0] sm:$0xf]
    %v156 = vld [vmem:[#allocation5 + $0xa4] sm:$0xf]
    %v157 = vld [vmem:[#allocation5 + $0xa8] sm:$0xf]
    %v158 = vld [vmem:[#allocation5 + $0xac] sm:$0xf]
    %v159 = vld [vmem:[#allocation5 + $0xb0] sm:$0xf]
    %v160 = vld [vmem:[#allocation5 + $0xb4] sm:$0xf]
    %v161 = vld [vmem:[#allocation5 + $0xb8] sm:$0xf]
    %v162 = vld [vmem:[#allocation5 + $0xbc] sm:$0xf]
    %v163 = vld [vmem:[#allocation5 + $0xc0] sm:$0xf]
    %v164 = vld [vmem:[#allocation5 + $0xc4] sm:$0xf]
    %v165 = vld [vmem:[#allocation5 + $0xc8] sm:$0xf]
    %v166 = vld [vmem:[#allocation5 + $0xcc] sm:$0xf]
    %v167 = vld [vmem:[#allocation5 + $0xd0] sm:$0xf]
    %v168 = vld [vmem:[#allocation5 + $0xd4] sm:$0xf]
    %v169 = vld [vmem:[#allocation5 + $0xd8] sm:$0xf]
    %v170 = vld [vmem:[#allocation5 + $0xdc] sm:$0xf]
    %v171 = vld [vmem:[#allocation5 + $0xe0] sm:$0xf]
    %v172 = vld [vmem:[#allocation5 + $0xe4] sm:$0xf]
    %v173 = vld [vmem:[#allocation5 + $0xe8] sm:$0xf]
    %v174 = vld [vmem:[#allocation5 + $0xec] sm:$0xf]
    %v175 = vld [vmem:[#allocation5 + $0xf0] sm:$0xf]
    %v176 = vld [vmem:[#allocation5 + $0xf4] sm:$0xf]
    %v177 = vld [vmem:[#allocation5 + $0xf8] sm:$0xf]
    %v178 = vld [vmem:[#allocation5 + $0xfc] sm:$0xf]
    %v179 = vld [vmem:[#allocation5 + $0x100] sm:$0xf]
    %v180 = vld [vmem:[#allocation5 + $0x104] sm:$0xf]
    %v181 = vld [vmem:[#allocation5 + $0x108] sm:$0xf]
    %v182 = vld [vmem:[#allocation5 + $0x10c] sm:$0xf]
    %v183 = vld [vmem:[#allocation5 + $0x110] sm:$0xf]
    %v184 = vld [vmem:[#allocation5 + $0x114] sm:$0xf]
    %v185 = vld [vmem:[#allocation5 + $0x118] sm:$0xf]
    %v186 = vld [vmem:[#allocation5 + $0x11c] sm:$0xf]
    %v187 = vld [vmem:[#allocation5 + $0x120] sm:$0xf]
    %v188 = vld [vmem:[#allocation5 + $0x124] sm:$0xf]
    %v189 = vld [vmem:[#allocation5 + $0x128] sm:$0xf]
    %v190 = vld [vmem:[#allocation5 + $0x12c] sm:$0xf]
    %v191 = vld [vmem:[#allocation5 + $0x130] sm:$0xf]
    %v192 = vld [vmem:[#allocation5 + $0x134] sm:$0xf]
    %v193 = vld [vmem:[#allocation5 + $0x138] sm:$0xf]
    %v194 = vld [vmem:[#allocation5 + $0x13c] sm:$0xf]
    %v195 = vld [vmem:[#allocation5 + $0x140] sm:$0xf]
    %v196 = vld [vmem:[#allocation5 + $0x144] sm:$0xf]
    %v197 = vld [vmem:[#allocation5 + $0x148] sm:$0xf]
    %v198 = vld [vmem:[#allocation5 + $0x14c] sm:$0xf]
    %v199 = vld [vmem:[#allocation5 + $0x150] sm:$0xf]
    %v200 = vld [vmem:[#allocation5 + $0x154] sm:$0xf]
    %v201 = vld [vmem:[#allocation5 + $0x158] sm:$0xf]
    %v202 = vld [vmem:[#allocation5 + $0x15c] sm:$0xf]
    %v203 = vld [vmem:[#allocation5 + $0x160] sm:$0xf]
    %v204 = vld [vmem:[#allocation5 + $0x164] sm:$0xf]
    %v205 = vld [vmem:[#allocation5 + $0x168] sm:$0xf]
    %v206 = vld [vmem:[#allocation5 + $0x16c] sm:$0xf]
    %v207 = vld [vmem:[#allocation5 + $0x170] sm:$0xf]
    %v208 = vld [vmem:[#allocation5 + $0x174] sm:$0xf]
    %v209 = vld [vmem:[#allocation5 + $0x178] sm:$0xf]
    %v210 = vld [vmem:[#allocation5 + $0x17c] sm:$0xf]
    %v211 = vld [vmem:[#allocation5 + $0x180] sm:$0xf]
    %v212 = vld [vmem:[#allocation5 + $0x184] sm:$0xf]
    %v213 = vld [vmem:[#allocation5 + $0x188] sm:$0xf]
    %v214 = vld [vmem:[#allocation5 + $0x18c] sm:$0xf]
    %v215 = vld [vmem:[#allocation5 + $0x190] sm:$0xf]
    %v216 = vld [vmem:[#allocation5 + $0x194] sm:$0xf]
    %v217 = vld [vmem:[#allocation5 + $0x198] sm:$0xf]
    %v218 = vld [vmem:[#allocation5 + $0x19c] sm:$0xf]
    %v219 = vld [vmem:[#allocation5 + $0x1a0] sm:$0xf]
    %v220 = vld [vmem:[#allocation5 + $0x1a4] sm:$0xf]
    %v221 = vld [vmem:[#allocation5 + $0x1a8] sm:$0xf]
    %v222 = vld [vmem:[#allocation5 + $0x1ac] sm:$0xf]
    %v223 = vld [vmem:[#allocation5 + $0x1b0] sm:$0xf]
    %v224 = vld [vmem:[#allocation5 + $0x1b4] sm:$0xf]
    %v225 = vld [vmem:[#allocation5 + $0x1b8] sm:$0xf]
    %v226 = vld [vmem:[#allocation5 + $0x1bc] sm:$0xf]
    %v339 = vunpack.c.l.b16 %v115
    %v340 = vunpack.c.l.b16 %v116
    %v341 = vunpack.c.l.b16 %v117
    %v342 = vunpack.c.l.b16 %v118
    %v343 = vunpack.c.l.b16 %v119
    %v344 = vunpack.c.l.b16 %v120
    %v345 = vunpack.c.l.b16 %v121
    %v346 = vunpack.c.l.b16 %v122
    %v347 = vunpack.c.l.b16 %v123
    %v348 = vunpack.c.l.b16 %v124
    %v349 = vunpack.c.l.b16 %v125
    %v350 = vunpack.c.l.b16 %v126
    %v351 = vunpack.c.l.b16 %v127
    %v352 = vunpack.c.l.b16 %v128
    %v353 = vunpack.c.l.b16 %v129
    %v354 = vunpack.c.l.b16 %v130
    %v355 = vunpack.c.l.b16 %v131
    %v356 = vunpack.c.l.b16 %v132
    %v357 = vunpack.c.l.b16 %v133
    %v358 = vunpack.c.l.b16 %v134
    %v359 = vunpack.c.l.b16 %v135
    %v360 = vunpack.c.l.b16 %v136
    %v361 = vunpack.c.l.b16 %v137
    %v362 = vunpack.c.l.b16 %v138
    %v363 = vunpack.c.l.b16 %v139
    %v364 = vunpack.c.l.b16 %v140
    %v365 = vunpack.c.l.b16 %v141
    %v366 = vunpack.c.l.b16 %v142
    %v367 = vunpack.c.l.b16 %v143
    %v368 = vunpack.c.l.b16 %v144
    %v369 = vunpack.c.l.b16 %v145
    %v370 = vunpack.c.l.b16 %v146
    %v371 = vunpack.c.l.b16 %v147
    %v372 = vunpack.c.l.b16 %v148
    %v373 = vunpack.c.l.b16 %v149
    %v374 = vunpack.c.l.b16 %v150
    %v375 = vunpack.c.l.b16 %v151
    %v376 = vunpack.c.l.b16 %v152
    %v377 = vunpack.c.l.b16 %v153
    %v378 = vunpack.c.l.b16 %v154
    %v379 = vunpack.c.l.b16 %v155
    %v380 = vunpack.c.l.b16 %v156
    %v381 = vunpack.c.l.b16 %v157
    %v382 = vunpack.c.l.b16 %v158
    %v383 = vunpack.c.l.b16 %v159
    %v384 = vunpack.c.l.b16 %v160
    %v385 = vunpack.c.l.b16 %v161
    %v386 = vunpack.c.l.b16 %v162
    %v387 = vunpack.c.l.b16 %v163
    %v388 = vunpack.c.l.b16 %v164
    %v389 = vunpack.c.l.b16 %v165
    %v390 = vunpack.c.l.b16 %v166
    %v391 = vunpack.c.l.b16 %v167
    %v392 = vunpack.c.l.b16 %v168
    %v393 = vunpack.c.l.b16 %v169
    %v394 = vunpack.c.l.b16 %v170
    %v395 = vunpack.c.l.b16 %v171
    %v396 = vunpack.c.l.b16 %v172
    %v397 = vunpack.c.l.b16 %v173
    %v398 = vunpack.c.l.b16 %v174
    %v399 = vunpack.c.l.b16 %v175
    %v400 = vunpack.c.l.b16 %v176
    %v401 = vunpack.c.l.b16 %v177
    %v402 = vunpack.c.l.b16 %v178
    %v403 = vunpack.c.l.b16 %v179
    %v404 = vunpack.c.l.b16 %v180
    %v405 = vunpack.c.l.b16 %v181
    %v406 = vunpack.c.l.b16 %v182
    %v407 = vunpack.c.l.b16 %v183
    %v408 = vunpack.c.l.b16 %v184
    %v409 = vunpack.c.l.b16 %v185
    %v410 = vunpack.c.l.b16 %v186
    %v411 = vunpack.c.l.b16 %v187
    %v412 = vunpack.c.l.b16 %v188
    %v413 = vunpack.c.l.b16 %v189
    %v414 = vunpack.c.l.b16 %v190
    %v415 = vunpack.c.l.b16 %v191
    %v416 = vunpack.c.l.b16 %v192
    %v417 = vunpack.c.l.b16 %v193
    %v418 = vunpack.c.l.b16 %v194
    %v419 = vunpack.c.l.b16 %v195
    %v420 = vunpack.c.l.b16 %v196
    %v421 = vunpack.c.l.b16 %v197
    %v422 = vunpack.c.l.b16 %v198
    %v423 = vunpack.c.l.b16 %v199
    %v424 = vunpack.c.l.b16 %v200
    %v425 = vunpack.c.l.b16 %v201
    %v426 = vunpack.c.l.b16 %v202
    %v427 = vunpack.c.l.b16 %v203
    %v428 = vunpack.c.l.b16 %v204
    %v429 = vunpack.c.l.b16 %v205
    %v430 = vunpack.c.l.b16 %v206
    %v431 = vunpack.c.l.b16 %v207
    %v432 = vunpack.c.l.b16 %v208
    %v433 = vunpack.c.l.b16 %v209
    %v434 = vunpack.c.l.b16 %v210
    %v435 = vunpack.c.l.b16 %v211
    %v436 = vunpack.c.l.b16 %v212
    %v437 = vunpack.c.l.b16 %v213
    %v438 = vunpack.c.l.b16 %v214
    %v439 = vunpack.c.l.b16 %v215
    %v440 = vunpack.c.l.b16 %v216
    %v441 = vunpack.c.l.b16 %v217
    %v442 = vunpack.c.l.b16 %v218
    %v443 = vunpack.c.l.b16 %v219
    %v444 = vunpack.c.l.b16 %v220
    %v445 = vunpack.c.l.b16 %v221
    %v446 = vunpack.c.l.b16 %v222
    %v447 = vunpack.c.l.b16 %v223
    %v448 = vunpack.c.l.b16 %v224
    %v449 = vunpack.c.l.b16 %v225
    %v450 = vunpack.c.l.b16 %v226
    %v451 = vpack.c.b16 %v340, %v339
    %v452 = vpack.c.b16 %v342, %v341
    %v453 = vpack.c.b16 %v344, %v343
    %v454 = vpack.c.b16 %v346, %v345
    %v455 = vpack.c.b16 %v348, %v347
    %v456 = vpack.c.b16 %v350, %v349
    %v457 = vpack.c.b16 %v352, %v351
    %v458 = vpack.c.b16 %v354, %v353
    %v459 = vpack.c.b16 %v356, %v355
    %v460 = vpack.c.b16 %v358, %v357
    %v461 = vpack.c.b16 %v360, %v359
    %v462 = vpack.c.b16 %v362, %v361
    %v463 = vpack.c.b16 %v364, %v363
    %v464 = vpack.c.b16 %v366, %v365
    %v465 = vpack.c.b16 %v368, %v367
    %v466 = vpack.c.b16 %v370, %v369
    %v467 = vpack.c.b16 %v372, %v371
    %v468 = vpack.c.b16 %v374, %v373
    %v469 = vpack.c.b16 %v376, %v375
    %v470 = vpack.c.b16 %v378, %v377
    %v471 = vpack.c.b16 %v380, %v379
    %v472 = vpack.c.b16 %v382, %v381
    %v473 = vpack.c.b16 %v384, %v383
    %v474 = vpack.c.b16 %v386, %v385
    %v475 = vpack.c.b16 %v388, %v387
    %v476 = vpack.c.b16 %v390, %v389
    %v477 = vpack.c.b16 %v392, %v391
    %v478 = vpack.c.b16 %v394, %v393
    %v479 = vpack.c.b16 %v396, %v395
    %v480 = vpack.c.b16 %v398, %v397
    %v481 = vpack.c.b16 %v400, %v399
    %v482 = vpack.c.b16 %v402, %v401
    %v483 = vpack.c.b16 %v404, %v403
    %v484 = vpack.c.b16 %v406, %v405
    %v485 = vpack.c.b16 %v408, %v407
    %v486 = vpack.c.b16 %v410, %v409
    %v487 = vpack.c.b16 %v412, %v411
    %v488 = vpack.c.b16 %v414, %v413
    %v489 = vpack.c.b16 %v416, %v415
    %v490 = vpack.c.b16 %v418, %v417
    %v491 = vpack.c.b16 %v420, %v419
    %v492 = vpack.c.b16 %v422, %v421
    %v493 = vpack.c.b16 %v424, %v423
    %v494 = vpack.c.b16 %v426, %v425
    %v495 = vpack.c.b16 %v428, %v427
    %v496 = vpack.c.b16 %v430, %v429
    %v497 = vpack.c.b16 %v432, %v431
    %v498 = vpack.c.b16 %v434, %v433
    %v499 = vpack.c.b16 %v436, %v435
    %v500 = vpack.c.b16 %v438, %v437
    %v501 = vpack.c.b16 %v440, %v439
    %v502 = vpack.c.b16 %v442, %v441
    %v503 = vpack.c.b16 %v444, %v443
    %v504 = vpack.c.b16 %v446, %v445
    %v505 = vpack.c.b16 %v448, %v447
    %v506 = vpack.c.b16 %v450, %v449
    %563 = vmatprep.subr.bf16.mxu0 0
    %564 = vmatpush1.bf16.msra.mxu0 %v451
    %565 = vmatprep.subr.bf16.mxu0 0
    %566 = vmatpush1.bf16.msra.mxu0 %v452
    %567 = vmatprep.subr.bf16.mxu0 0
    %568 = vmatpush1.bf16.msra.mxu0 %v453
    %569 = vmatprep.subr.bf16.mxu0 0
    %570 = vmatpush1.bf16.msra.mxu0 %v454
    %571 = vmatprep.subr.bf16.mxu0 0
    %572 = vmatpush1.bf16.msra.mxu0 %v455
    %573 = vmatprep.subr.bf16.mxu0 0
    %574 = vmatpush1.bf16.msra.mxu0 %v456
    %575 = vmatprep.subr.bf16.mxu0 0
    %576 = vmatpush1.bf16.msra.mxu0 %v457
    %577 = vmatprep.subr.bf16.mxu0 0
    %578 = vmatpush1.bf16.msra.mxu0 %v458
    %579 = vmatprep.subr.bf16.mxu0 0
    %580 = vmatpush1.bf16.msra.mxu0 %v459
    %581 = vmatprep.subr.bf16.mxu0 0
    %582 = vmatpush1.bf16.msra.mxu0 %v460
    %583 = vmatprep.subr.bf16.mxu0 0
    %584 = vmatpush1.bf16.msra.mxu0 %v461
    %585 = vmatprep.subr.bf16.mxu0 0
    %586 = vmatpush1.bf16.msra.mxu0 %v462
    %587 = vmatprep.subr.bf16.mxu0 0
    %588 = vmatpush1.bf16.msra.mxu0 %v463
    %589 = vmatprep.subr.bf16.mxu0 0
    %590 = vmatpush1.bf16.msra.mxu0 %v464
    %591 = vmatprep.subr.bf16.mxu0 0
    %592 = vmatpush1.bf16.msra.mxu0 %v465
    %593 = vmatprep.subr.bf16.mxu0 0
    %594 = vmatpush1.bf16.msra.mxu0 %v466
    %595 = vmatprep.mubr.bf16.mxu0 %v109
    %596 = vmatmul.mubr.bf16.gmra.mrb[0].mxu0 %v108
    %v597 = vpop.f32.mrb[0].mxu0
    %v598 = vadd.f32 0.0, %v597
    %v599 = vpop.f32.mrb[0].mxu0
    %v600 = vpop.f32.mrb[0].mxu0
    %v601 = vpop.f32.mrb[0].mxu0
    %602 = vdwg.mxu0
    %603 = vmatprep.subr.bf16.mxu0 0
    %604 = vmatpush1.bf16.msra.mxu0 %v467
    %605 = vmatprep.subr.bf16.mxu0 0
    %606 = vmatpush1.bf16.msra.mxu0 %v468
    %607 = vmatprep.subr.bf16.mxu0 0
    %608 = vmatpush1.bf16.msra.mxu0 %v469
    %609 = vmatprep.subr.bf16.mxu0 0
    %610 = vmatpush1.bf16.msra.mxu0 %v470
    %611 = vmatprep.subr.bf16.mxu0 0
    %612 = vmatpush1.bf16.msra.mxu0 %v471
    %613 = vmatprep.subr.bf16.mxu0 0
    %614 = vmatpush1.bf16.msra.mxu0 %v472
    %615 = vmatprep.subr.bf16.mxu0 0
    %616 = vmatpush1.bf16.msra.mxu0 %v473
    %617 = vmatprep.subr.bf16.mxu0 0
    %618 = vmatpush1.bf16.msra.mxu0 %v474
    %619 = vmatprep.subr.bf16.mxu0 0
    %620 = vmatpush1.bf16.msra.mxu0 %v475
    %621 = vmatprep.subr.bf16.mxu0 0
    %622 = vmatpush1.bf16.msra.mxu0 %v476
    %623 = vmatprep.subr.bf16.mxu0 0
    %624 = vmatpush1.bf16.msra.mxu0 %v477
    %625 = vmatprep.subr.bf16.mxu0 0
    %626 = vmatpush1.bf16.msra.mxu0 %v478
    %627 = vmatprep.subr.bf16.mxu0 0
    %628 = vmatpush1.bf16.msra.mxu0 %v479
    %629 = vmatprep.subr.bf16.mxu0 0
    %630 = vmatpush1.bf16.msra.mxu0 %v480
    %631 = vmatprep.subr.bf16.mxu0 0
    %632 = vmatpush1.bf16.msra.mxu0 %v481
    %633 = vmatprep.subr.bf16.mxu0 0
    %634 = vmatpush1.bf16.msra.mxu0 %v482
    %635 = vmatprep.mubr.bf16.mxu0 %v111
    %636 = vmatmul.mubr.bf16.gmra.mrb[0].mxu0 %v110
    %v637 = vpop.f32.mrb[0].mxu0
    %v638 = vadd.f32 %v598, %v637
    %v639 = vpop.f32.mrb[0].mxu0
    %v640 = vpop.f32.mrb[0].mxu0
    %v641 = vpop.f32.mrb[0].mxu0
    %642 = vdwg.mxu0
    %643 = vmatprep.subr.bf16.mxu0 0
    %644 = vmatpush1.bf16.msra.mxu0 %v483
    %645 = vmatprep.subr.bf16.mxu0 0
    %646 = vmatpush1.bf16.msra.mxu0 %v484
    %647 = vmatprep.subr.bf16.mxu0 0
    %648 = vmatpush1.bf16.msra.mxu0 %v485
    %649 = vmatprep.subr.bf16.mxu0 0
    %650 = vmatpush1.bf16.msra.mxu0 %v486
    %651 = vmatprep.subr.bf16.mxu0 0
    %652 = vmatpush1.bf16.msra.mxu0 %v487
    %653 = vmatprep.subr.bf16.mxu0 0
    %654 = vmatpush1.bf16.msra.mxu0 %v488
    %655 = vmatprep.subr.bf16.mxu0 0
    %656 = vmatpush1.bf16.msra.mxu0 %v489
    %657 = vmatprep.subr.bf16.mxu0 0
    %658 = vmatpush1.bf16.msra.mxu0 %v490
    %659 = vmatprep.subr.bf16.mxu0 0
    %660 = vmatpush1.bf16.msra.mxu0 %v491
    %661 = vmatprep.subr.bf16.mxu0 0
    %662 = vmatpush1.bf16.msra.mxu0 %v492
    %663 = vmatprep.subr.bf16.mxu0 0
    %664 = vmatpush1.bf16.msra.mxu0 %v493
    %665 = vmatprep.subr.bf16.mxu0 0
    %666 = vmatpush1.bf16.msra.mxu0 %v494
    %667 = vmatprep.subr.bf16.mxu0 0
    %668 = vmatpush1.bf16.msra.mxu0 %v495
    %669 = vmatprep.subr.bf16.mxu0 0
    %670 = vmatpush1.bf16.msra.mxu0 %v496
    %671 = vmatprep.subr.bf16.mxu0 0
    %672 = vmatpush1.bf16.msra.mxu0 %v497
    %673 = vmatprep.subr.bf16.mxu0 0
    %674 = vmatpush1.bf16.msra.mxu0 %v498
    %675 = vmatprep.mubr.bf16.mxu0 %v113
    %676 = vmatmul.mubr.bf16.gmra.mrb[0].mxu0 %v112
    %v677 = vpop.f32.mrb[0].mxu0
    %v678 = vadd.f32 %v638, %v677
    %v679 = vpop.f32.mrb[0].mxu0
    %v680 = vpop.f32.mrb[0].mxu0
    %v681 = vpop.f32.mrb[0].mxu0
    %682 = vdwg.mxu0
    %683 = vmatprep.subr.bf16.mxu0 0
    %684 = vmatpush1.bf16.msra.mxu0 %v499
    %685 = vmatprep.subr.bf16.mxu0 0
    %686 = vmatpush1.bf16.msra.mxu0 %v500
    %687 = vmatprep.subr.bf16.mxu0 0
    %688 = vmatpush1.bf16.msra.mxu0 %v501
    %689 = vmatprep.subr.bf16.mxu0 0
    %690 = vmatpush1.bf16.msra.mxu0 %v502
    %691 = vmatprep.subr.bf16.mxu0 0
    %692 = vmatpush1.bf16.msra.mxu0 %v503
    %693 = vmatprep.subr.bf16.mxu0 0
    %694 = vmatpush1.bf16.msra.mxu0 %v504
    %695 = vmatprep.subr.bf16.mxu0 0
    %696 = vmatpush1.bf16.msra.mxu0 %v505
    %697 = vmatprep.subr.bf16.mxu0 0
    %698 = vmatpush1.bf16.msra.mxu0 %v506
    %699 = vmatprep.subr.bf16.mxu0 0
    %700 = vmatpush1.bf16.msra.mxu0 0
    %701 = vmatprep.subr.bf16.mxu0 0
    %702 = vmatpush1.bf16.msra.mxu0 0
    %703 = vmatprep.subr.bf16.mxu0 0
    %704 = vmatpush1.bf16.msra.mxu0 0
    %705 = vmatprep.subr.bf16.mxu0 0
    %706 = vmatpush1.bf16.msra.mxu0 0
    %707 = vmatprep.subr.bf16.mxu0 0
    %708 = vmatpush1.bf16.msra.mxu0 0
    %709 = vmatprep.subr.bf16.mxu0 0
    %710 = vmatpush1.bf16.msra.mxu0 0
    %711 = vmatprep.subr.bf16.mxu0 0
    %712 = vmatpush1.bf16.msra.mxu0 0
    %713 = vmatprep.subr.bf16.mxu0 0
    %714 = vmatpush1.bf16.msra.mxu0 0
    %715 = vmatprep.mubr.bf16.mxu0 0
    %716 = vmatmul.mubr.bf16.gmra.mrb[0].mxu0 %v114
    %v717 = vpop.f32.mrb[0].mxu0
    %v718 = vadd.f32 %v678, %v717
    %v719 = vpop.f32.mrb[0].mxu0
    %v720 = vpop.f32.mrb[0].mxu0
    %v721 = vpop.f32.mrb[0].mxu0
    %722 = vdwg.mxu0
    %s723 = sld [smem:[#allocation2]]
    %v724 = vstv %s723
    %v725 = vmul.f32 %v78, %v724
    %v726 = vmul.f32 %v718, %v725
    %v727 = vand.u32 2147483647, %v726
    %728 = vmax.xlane.f32.xlu0 %v727
    %v729 = vpop.xlane.xlu0 %728
    %v730 = vrot.slane %v729, 4
    %v731 = vmax.f32 %v729, %v730
    %v732 = vrot.slane %v731, 2
    %v733 = vmax.f32 %v731, %v732
    %v734 = vrot.slane %v733, 1
    %v735 = vmax.f32 %v733, %v734
    %s736 = vtos %v735
    %v737 = vstv %s736
    %v738 = vmul.f32 %v737, %v75
    %vm739 = vcmp.gt.f32.partialorder %v738, 0.0
    %v740 = vsel %vm739, %v738, 1.0
    %v741 = vrcp.pop %v740
    %v742 = vmul.f32 %v726, %v741
    %v743 = vround.ne.pseudo %v742
    %v744 = vmax.f32 %v743, -128.0
    %v745 = vmin.f32 %v744, 127.0
    %v746 = vmul.f32 %v745, %v740
    %v747 = vtanh.pop %v746
    %v748 = vand.u32 2147483647, %v747
    %749 = vmax.xlane.f32.xlu0 %v748
    %v750 = vpop.xlane.xlu0 %749
    %v751 = vrot.slane %v750, 4
    %v752 = vmax.f32 %v750, %v751
    %v753 = vrot.slane %v752, 2
    %v754 = vmax.f32 %v752, %v753
    %v755 = vrot.slane %v754, 1
    %v756 = vmax.f32 %v754, %v755
    %s757 = vtos %v756
    %v758 = vstv %s757
    %v759 = vmul.f32 %v758, %v75
    %vm760 = vcmp.gt.f32.partialorder %v759, 0.0
    %v761 = vsel %vm760, %v759, 1.0
    %v762 = vrcp.pop %v761
    %v763 = vmul.f32 %v747, %v762
    %v764 = vround.ne.pseudo %v763
    %v765 = vmax.f32 %v764, -128.0
    %v766 = vmin.f32 %v765, 127.0
    %v767 = vpack.c.bf16 %v766, %v766
    %v768 = vld [vmem:[%s3] sm:$0xf]
    %v769 = vld [vmem:[%s3 + $0x4] sm:$0xf]
    %v770 = vld [vmem:[%s3 + $0x8] sm:$0xf]
    %v771 = vld [vmem:[%s3 + $0xc] sm:$0xf]
    %v772 = vld [vmem:[%s3 + $0x10] sm:$0xf]
    %v773 = vld [vmem:[%s3 + $0x14] sm:$0xf]
    %v774 = vld [vmem:[%s3 + $0x18] sm:$0xf]
    %v775 = vld [vmem:[%s3 + $0x1c] sm:$0xf]
    %v776 = vld [vmem:[%s3 + $0x20] sm:$0xf]
    %v777 = vld [vmem:[%s3 + $0x24] sm:$0xf]
    %v778 = vld [vmem:[%s3 + $0x28] sm:$0xf]
    %v779 = vld [vmem:[%s3 + $0x2c] sm:$0xf]
    %v780 = vld [vmem:[%s3 + $0x30] sm:$0xf]
    %v781 = vld [vmem:[%s3 + $0x34] sm:$0xf]
    %v782 = vld [vmem:[%s3 + $0x38] sm:$0xf]
    %v783 = vld [vmem:[%s3 + $0x3c] sm:$0xf]
    %v800 = vunpack.c.l.b16 %v768
    %v801 = vunpack.c.l.b16 %v769
    %v802 = vunpack.c.l.b16 %v770
    %v803 = vunpack.c.l.b16 %v771
    %v804 = vunpack.c.l.b16 %v772
    %v805 = vunpack.c.l.b16 %v773
    %v806 = vunpack.c.l.b16 %v774
    %v807 = vunpack.c.l.b16 %v775
    %v808 = vunpack.c.l.b16 %v776
    %v809 = vunpack.c.l.b16 %v777
    %v810 = vunpack.c.l.b16 %v778
    %v811 = vunpack.c.l.b16 %v779
    %v812 = vunpack.c.l.b16 %v780
    %v813 = vunpack.c.l.b16 %v781
    %v814 = vunpack.c.l.b16 %v782
    %v815 = vunpack.c.l.b16 %v783
    %v816 = vpack.c.b16 %v801, %v800
    %v817 = vpack.c.b16 %v803, %v802
    %v818 = vpack.c.b16 %v805, %v804
    %v819 = vpack.c.b16 %v807, %v806
    %v820 = vpack.c.b16 %v809, %v808
    %v821 = vpack.c.b16 %v811, %v810
    %v822 = vpack.c.b16 %v813, %v812
    %v823 = vpack.c.b16 %v815, %v814
    %832 = vmatprep.subr.bf16.mxu0 0
    %833 = vmatpush1.bf16.msra.mxu0 %v816
    %834 = vmatprep.subr.bf16.mxu0 0
    %835 = vmatpush1.bf16.msra.mxu0 %v817
    %836 = vmatprep.subr.bf16.mxu0 0
    %837 = vmatpush1.bf16.msra.mxu0 %v818
    %838 = vmatprep.subr.bf16.mxu0 0
    %839 = vmatpush1.bf16.msra.mxu0 %v819
    %840 = vmatprep.subr.bf16.mxu0 0
    %841 = vmatpush1.bf16.msra.mxu0 %v820
    %842 = vmatprep.subr.bf16.mxu0 0
    %843 = vmatpush1.bf16.msra.mxu0 %v821
    %844 = vmatprep.subr.bf16.mxu0 0
    %845 = vmatpush1.bf16.msra.mxu0 %v822
    %846 = vmatprep.subr.bf16.mxu0 0
    %847 = vmatpush1.bf16.msra.mxu0 %v823
    %848 = vmatprep.subr.bf16.mxu0 0
    %849 = vmatpush1.bf16.msra.mxu0 0
    %850 = vmatprep.subr.bf16.mxu0 0
    %851 = vmatpush1.bf16.msra.mxu0 0
    %852 = vmatprep.subr.bf16.mxu0 0
    %853 = vmatpush1.bf16.msra.mxu0 0
    %854 = vmatprep.subr.bf16.mxu0 0
    %855 = vmatpush1.bf16.msra.mxu0 0
    %856 = vmatprep.subr.bf16.mxu0 0
    %857 = vmatpush1.bf16.msra.mxu0 0
    %858 = vmatprep.subr.bf16.mxu0 0
    %859 = vmatpush1.bf16.msra.mxu0 0
    %860 = vmatprep.subr.bf16.mxu0 0
    %861 = vmatpush1.bf16.msra.mxu0 0
    %862 = vmatprep.subr.bf16.mxu0 0
    %863 = vmatpush1.bf16.msra.mxu0 0
    %864 = vmatprep.mubr.bf16.mxu0 0
    %865 = vmatmul.mubr.bf16.gmra.mrb[0].mxu0 %v767
    %v866 = vpop.f32.mrb[0].mxu0
    %v867 = vadd.f32 0.0, %v866
    %v868 = vpop.f32.mrb[0].mxu0
    %v869 = vpop.f32.mrb[0].mxu0
    %v870 = vpop.f32.mrb[0].mxu0
    %871 = vdwg.mxu0
    %s872 = sld [smem:[#allocation2 + $0x1]]
    %v873 = vstv %s872
    %v874 = vmul.f32 %v761, %v873
    %v875 = vmul.f32 %v867, %v874
    %v876 = vand.u32 2147483647, %v875
    %877 = vmax.xlane.f32.xlu0 %v876
    %v878 = vpop.xlane.xlu0 %877
    %v879 = vrot.slane %v878, 4
    %v880 = vmax.f32 %v878, %v879
    %v881 = vrot.slane %v880, 2
    %v882 = vmax.f32 %v880, %v881
    %v883 = vrot.slane %v882, 1
    %v884 = vmax.f32 %v882, %v883
    %s885 = vtos %v884
    %v886 = vstv %s885
    %v887 = vmul.f32 %v886, %v75
    %vm888 = vcmp.gt.f32.partialorder %v887, 0.0
    %v889 = vsel %vm888, %v887, 1.0
    %v890 = vrcp.pop %v889
    %v891 = vmul.f32 %v875, %v890
    %v892 = vround.ne.pseudo %v891
    %v893 = vmax.f32 %v892, -128.0
    %v894 = vmin.f32 %v893, 127.0
    %v895 = vmul.f32 %v894, %v889
    %896 = vst [vmem:[%s4] sm:$0xff] %v895
    // Predicated region
    $region26: #{linear_model_forward.1} parent=1 // pred_check
      _
    $region27: #{linear_model_forward.1} parent=1 // pred_check_branch
      %898 = sbr.rel (0) target = $region29
    $region28: #{linear_model_forward.1} parent=1 // pred_region
      _
    $region29: #{linear_model_forward.1} parent=1 // pred_fallthru
      _
    // Predicated region
    $region30: #{linear_model_forward.1} parent=1 // pred_check
      _
    $region31: #{linear_model_forward.1} parent=1 // pred_check_branch
      %900 = sbr.rel (0) target = $region33
    $region32: #{linear_model_forward.1} parent=1 // pred_region
      _
    $region33: #{linear_model_forward.1} parent=1 // pred_fallthru
      _
    %901 = vsyncpa [#allocation3], 1
    %902 = vsyncpa [#allocation4], 1

</llo_original>
